<compile_context>
chip_gen: v7x
topology: tpu7x:2x2x1
jax: 0.10.0
libtpu: 0.0.40
codegen_flags: <defaults>
</compile_context>

<pallas_src>
import jax
import jax.numpy as jnp
from jax.experimental import pallas as pl
from jax.experimental.pallas import tpu as pltpu


def mlp_kernel(x_ref,
               w0_ref, b0_ref,
               w1_ref, b1_ref,
               w2_ref, b2_ref,
               w3_ref, b3_ref,
               o_ref):
    # x_ref: [8, TB]  (features on sublanes, batch on lanes)
    h = x_ref[...]

    # fc0 + sigmoid : [8,8] @ [8,TB] -> [8,TB]
    h = jnp.dot(w0_ref[...], h, preferred_element_type=jnp.float32) + b0_ref[...]
    h = jax.nn.sigmoid(h)

    # fc1 + sigmoid : [4,8] @ [8,TB] -> [4,TB]
    h = jnp.dot(w1_ref[...], h, preferred_element_type=jnp.float32) + b1_ref[...]
    h = jax.nn.sigmoid(h)

    # fc2 + sigmoid : [2,4] @ [4,TB] -> [2,TB]
    h = jnp.dot(w2_ref[...], h, preferred_element_type=jnp.float32) + b2_ref[...]
    h = jax.nn.sigmoid(h)

    # fc3 (no activation) : [2,2] @ [2,TB] -> [2,TB]
    h = jnp.dot(w3_ref[...], h, preferred_element_type=jnp.float32) + b3_ref[...]

    o_ref[...] = h.astype(o_ref.dtype)


def mlp_forward(x, params):
    """x: [B, 8] float32; params: PyTorch-layout weights [out,in], biases [out,1]."""
    B = x.shape[0]
    w0, b0 = params["w0"], params["b0"]
    w1, b1 = params["w1"], params["b1"]
    w2, b2 = params["w2"], params["b2"]
    w3, b3 = params["w3"], params["b3"]

    # Batch tile on the 128-lane axis.  Cap at 512 lanes (16 KiB f32 tile,
    # double-buffered) -> safe for v5e's 16 MiB scoped VMEM and v7x's 64 MiB.
    tb = min(512, pl.cdiv(B, 128) * 128)
    b_pad = pl.cdiv(B, tb) * tb
    n_blocks = b_pad // tb

    # Lane-dense layout: batch on lanes, features on sublanes.
    x_t = jnp.pad(jnp.transpose(x), ((0, 0), (0, b_pad - B)))

    const = lambda a: pl.BlockSpec(a.shape, lambda i: (0,) * a.ndim)

    cost = pl.CostEstimate(
        flops=2 * (8 * 8 + 8 * 4 + 4 * 2 + 2 * 2) * b_pad,
        transcendentals=(8 + 4 + 2) * b_pad,
        bytes_accessed=(8 + 2) * 4 * b_pad + 4 * (8 * 8 + 8 * 4 + 4 * 2 + 2 * 2 + 8 + 4 + 2 + 2),
    )

    out_t = pl.pallas_call(
        mlp_kernel,
        out_shape=jax.ShapeDtypeStruct((2, b_pad), jnp.float32),
        grid=(n_blocks,),
        in_specs=[pl.BlockSpec((8, tb), lambda i: (0, i)),
                  const(w0), const(b0),
                  const(w1), const(b1),
                  const(w2), const(b2),
                  const(w3), const(b3)],
        out_specs=pl.BlockSpec((2, tb), lambda i: (0, i)),
        compiler_params=pltpu.CompilerParams(
            dimension_semantics=("parallel",)),
        cost_estimate=cost,
    )(x_t, w0, b0, w1, b1, w2, b2, w3, b3)

    # Back to PyTorch layout [B, 2].
    return jnp.transpose(out_t[:, :B])


def init_params(key):
    """Deterministic init mimicking nn.Linear's uniform(-1/sqrt(in), 1/sqrt(in)).

    Weights are stored in PyTorch layout [out, in]; biases as [out, 1] so they
    broadcast across the lane (batch) axis inside the kernel.
    """
    dims = [(8, 8), (8, 4), (4, 2), (2, 2)]   # (fan_in, fan_out)
    params = {}
    for i, (fan_in, fan_out) in enumerate(dims):
        key, kw, kb = jax.random.split(key, 3)
        bound = 1.0 / jnp.sqrt(float(fan_in))
        params[f"w{i}"] = jax.random.uniform(
            kw, (fan_out, fan_in), jnp.float32, minval=-bound, maxval=bound)
        params[f"b{i}"] = jax.random.uniform(
            kb, (fan_out, 1), jnp.float32, minval=-bound, maxval=bound)
    return params


def mlp_reference(x, params):
    h = jax.nn.sigmoid(x @ params["w0"].T + params["b0"].T)
    h = jax.nn.sigmoid(h @ params["w1"].T + params["b1"].T)
    h = jax.nn.sigmoid(h @ params["w2"].T + params["b2"].T)
    return h @ params["w3"].T + params["b3"].T


if __name__ == "__main__":
    key = jax.random.PRNGKey(0)
    key, kx, kx2 = jax.random.split(key, 3)
    params = init_params(key)

    # Primary small-shape check (module fixes features at 8).
    B = 2
    x = jax.random.normal(kx, (B, 8), dtype=jnp.float32)
    out = jax.block_until_ready(mlp_forward(x, params))
    ref = mlp_reference(x, params)
    assert out.shape == (B, 2), out.shape
    assert jnp.allclose(out, ref, atol=1e-5, rtol=1e-5), (out, ref)

    # Secondary check exercising padding + multi-block pipelined grid.
    B2 = 640
    x2 = jax.random.normal(kx2, (B2, 8), dtype=jnp.float32)
    out2 = jax.block_until_ready(mlp_forward(x2, params))
    ref2 = mlp_reference(x2, params)
    assert out2.shape == (B2, 2), out2.shape
    assert jnp.allclose(out2, ref2, atol=1e-5, rtol=1e-5)

    print("KERNEL_OK")
</pallas_src>

<mosaic_0001>
module attributes {stable_mosaic.version = 11 : i64} {
  func.func @mlp_kernel(%arg0: i32, %arg1: memref<8x128xf32, #tpu.memory_space<vmem>>, %arg2: memref<8x8xf32, #tpu.memory_space<vmem>>, %arg3: memref<8x1xf32, #tpu.memory_space<vmem>>, %arg4: memref<4x8xf32, #tpu.memory_space<vmem>>, %arg5: memref<4x1xf32, #tpu.memory_space<vmem>>, %arg6: memref<2x4xf32, #tpu.memory_space<vmem>>, %arg7: memref<2x1xf32, #tpu.memory_space<vmem>>, %arg8: memref<2x2xf32, #tpu.memory_space<vmem>>, %arg9: memref<2x1xf32, #tpu.memory_space<vmem>>, %arg10: memref<2x128xf32, #tpu.memory_space<vmem>>) attributes {dimension_semantics = [#tpu.dimension_semantics<parallel>], iteration_bounds = array<i64: 1>, scalar_prefetch = 0 : i64, scratch_operands = 0 : i64, tpu.core_type = #tpu.core_type<tc>, window_params = [{transform_indices = @transform_0, window_bounds = array<i64: 8, 128>}, {pipeline_mode = #tpu.pipeline_mode<synchronous>, transform_indices = @transform_1, window_bounds = array<i64: 8, 8>}, {pipeline_mode = #tpu.pipeline_mode<synchronous>, transform_indices = @transform_2, window_bounds = array<i64: 8, 1>}, {pipeline_mode = #tpu.pipeline_mode<synchronous>, transform_indices = @transform_3, window_bounds = array<i64: 4, 8>}, {pipeline_mode = #tpu.pipeline_mode<synchronous>, transform_indices = @transform_4, window_bounds = array<i64: 4, 1>}, {pipeline_mode = #tpu.pipeline_mode<synchronous>, transform_indices = @transform_5, window_bounds = array<i64: 2, 4>}, {pipeline_mode = #tpu.pipeline_mode<synchronous>, transform_indices = @transform_6, window_bounds = array<i64: 2, 1>}, {pipeline_mode = #tpu.pipeline_mode<synchronous>, transform_indices = @transform_7, window_bounds = array<i64: 2, 2>}, {pipeline_mode = #tpu.pipeline_mode<synchronous>, transform_indices = @transform_8, window_bounds = array<i64: 2, 1>}, {transform_indices = @transform_9, window_bounds = array<i64: 2, 128>}]} {
    %c0 = arith.constant 0 : index
    %c0_0 = arith.constant 0 : index
    %0 = vector.load %arg1[%c0, %c0_0] : memref<8x128xf32, #tpu.memory_space<vmem>>, vector<8x128xf32>
    %c0_1 = arith.constant 0 : index
    %c0_2 = arith.constant 0 : index
    %1 = vector.load %arg2[%c0_1, %c0_2] : memref<8x8xf32, #tpu.memory_space<vmem>>, vector<8x8xf32>
    %cst = arith.constant dense<0.000000e+00> : vector<8x128xf32>
    %2 = tpu.matmul %1, %0, %cst {dimension_numbers = #tpu.dot_dimension_numbers<[1], [0], [0], [1], [0, 0, 1, 1], [], []>} : vector<8x8xf32>, vector<8x128xf32>, vector<8x128xf32> -> vector<8x128xf32>
    %c0_3 = arith.constant 0 : index
    %c0_4 = arith.constant 0 : index
    %3 = vector.load %arg3[%c0_3, %c0_4] : memref<8x1xf32, #tpu.memory_space<vmem>>, vector<8x1xf32>
    %4 = vector.broadcast %3 : vector<8x1xf32> to vector<8x128xf32>
    %5 = arith.addf %2, %4 : vector<8x128xf32>
    %6 = arith.negf %5 : vector<8x128xf32>
    %7 = math.exp %6 : vector<8x128xf32>
    %cst_5 = arith.constant 1.000000e+00 : f32
    %8 = vector.broadcast %cst_5 : f32 to vector<8x128xf32>
    %9 = arith.addf %8, %7 : vector<8x128xf32>
    %10 = arith.divf %8, %9 : vector<8x128xf32>
    %c0_6 = arith.constant 0 : index
    %c0_7 = arith.constant 0 : index
    %11 = vector.load %arg4[%c0_6, %c0_7] : memref<4x8xf32, #tpu.memory_space<vmem>>, vector<4x8xf32>
    %cst_8 = arith.constant dense<0.000000e+00> : vector<4x128xf32>
    %12 = tpu.matmul %11, %10, %cst_8 {dimension_numbers = #tpu.dot_dimension_numbers<[1], [0], [0], [1], [0, 0, 1, 1], [], []>} : vector<4x8xf32>, vector<8x128xf32>, vector<4x128xf32> -> vector<4x128xf32>
    %c0_9 = arith.constant 0 : index
    %c0_10 = arith.constant 0 : index
    %13 = vector.load %arg5[%c0_9, %c0_10] : memref<4x1xf32, #tpu.memory_space<vmem>>, vector<4x1xf32>
    %14 = vector.broadcast %13 : vector<4x1xf32> to vector<4x128xf32>
    %15 = arith.addf %12, %14 : vector<4x128xf32>
    %16 = arith.negf %15 : vector<4x128xf32>
    %17 = math.exp %16 : vector<4x128xf32>
    %cst_11 = arith.constant 1.000000e+00 : f32
    %18 = vector.broadcast %cst_11 : f32 to vector<4x128xf32>
    %19 = arith.addf %18, %17 : vector<4x128xf32>
    %20 = arith.divf %18, %19 : vector<4x128xf32>
    %c0_12 = arith.constant 0 : index
    %c0_13 = arith.constant 0 : index
    %21 = vector.load %arg6[%c0_12, %c0_13] : memref<2x4xf32, #tpu.memory_space<vmem>>, vector<2x4xf32>
    %cst_14 = arith.constant dense<0.000000e+00> : vector<2x128xf32>
    %22 = tpu.matmul %21, %20, %cst_14 {dimension_numbers = #tpu.dot_dimension_numbers<[1], [0], [0], [1], [0, 0, 1, 1], [], []>} : vector<2x4xf32>, vector<4x128xf32>, vector<2x128xf32> -> vector<2x128xf32>
    %c0_15 = arith.constant 0 : index
    %c0_16 = arith.constant 0 : index
    %23 = vector.load %arg7[%c0_15, %c0_16] : memref<2x1xf32, #tpu.memory_space<vmem>>, vector<2x1xf32>
    %24 = vector.broadcast %23 : vector<2x1xf32> to vector<2x128xf32>
    %25 = arith.addf %22, %24 : vector<2x128xf32>
    %26 = arith.negf %25 : vector<2x128xf32>
    %27 = math.exp %26 : vector<2x128xf32>
    %cst_17 = arith.constant 1.000000e+00 : f32
    %28 = vector.broadcast %cst_17 : f32 to vector<2x128xf32>
    %29 = arith.addf %28, %27 : vector<2x128xf32>
    %30 = arith.divf %28, %29 : vector<2x128xf32>
    %c0_18 = arith.constant 0 : index
    %c0_19 = arith.constant 0 : index
    %31 = vector.load %arg8[%c0_18, %c0_19] : memref<2x2xf32, #tpu.memory_space<vmem>>, vector<2x2xf32>
    %cst_20 = arith.constant dense<0.000000e+00> : vector<2x128xf32>
    %32 = tpu.matmul %31, %30, %cst_20 {dimension_numbers = #tpu.dot_dimension_numbers<[1], [0], [0], [1], [0, 0, 1, 1], [], []>} : vector<2x2xf32>, vector<2x128xf32>, vector<2x128xf32> -> vector<2x128xf32>
    %c0_21 = arith.constant 0 : index
    %c0_22 = arith.constant 0 : index
    %33 = vector.load %arg9[%c0_21, %c0_22] : memref<2x1xf32, #tpu.memory_space<vmem>>, vector<2x1xf32>
    %34 = vector.broadcast %33 : vector<2x1xf32> to vector<2x128xf32>
    %35 = arith.addf %32, %34 : vector<2x128xf32>
    %c0_23 = arith.constant 0 : index
    %c0_24 = arith.constant 0 : index
    %36 = vector.load %arg10[%c0_23, %c0_24] : memref<2x128xf32, #tpu.memory_space<vmem>>, vector<2x128xf32>
    tpu.vector_store %arg10[%c0_23, %c0_24], %35 {strides = array<i32>} : memref<2x128xf32, #tpu.memory_space<vmem>>, vector<2x128xf32>,
    return
  }
  func.func @transform_0(%arg0: i32) -> (i32, i32) {
    %c0_i32 = arith.constant 0 : i32
    %c0_i32_0 = arith.constant 0 : i32
    return %c0_i32, %arg0 : i32, i32
  }
  func.func @transform_1(%arg0: i32) -> (i32, i32) {
    %c0_i32 = arith.constant 0 : i32
    %c0_i32_0 = arith.constant 0 : i32
    %c0_i32_1 = arith.constant 0 : i32
    return %c0_i32, %c0_i32_0 : i32, i32
  }
  func.func @transform_2(%arg0: i32) -> (i32, i32) {
    %c0_i32 = arith.constant 0 : i32
    %c0_i32_0 = arith.constant 0 : i32
    %c0_i32_1 = arith.constant 0 : i32
    return %c0_i32, %c0_i32_0 : i32, i32
  }
  func.func @transform_3(%arg0: i32) -> (i32, i32) {
    %c0_i32 = arith.constant 0 : i32
    %c0_i32_0 = arith.constant 0 : i32
    %c0_i32_1 = arith.constant 0 : i32
    return %c0_i32, %c0_i32_0 : i32, i32
  }
  func.func @transform_4(%arg0: i32) -> (i32, i32) {
    %c0_i32 = arith.constant 0 : i32
    %c0_i32_0 = arith.constant 0 : i32
    %c0_i32_1 = arith.constant 0 : i32
    return %c0_i32, %c0_i32_0 : i32, i32
  }
  func.func @transform_5(%arg0: i32) -> (i32, i32) {
    %c0_i32 = arith.constant 0 : i32
    %c0_i32_0 = arith.constant 0 : i32
    %c0_i32_1 = arith.constant 0 : i32
    return %c0_i32, %c0_i32_0 : i32, i32
  }
  func.func @transform_6(%arg0: i32) -> (i32, i32) {
    %c0_i32 = arith.constant 0 : i32
    %c0_i32_0 = arith.constant 0 : i32
    %c0_i32_1 = arith.constant 0 : i32
    return %c0_i32, %c0_i32_0 : i32, i32
  }
  func.func @transform_7(%arg0: i32) -> (i32, i32) {
    %c0_i32 = arith.constant 0 : i32
    %c0_i32_0 = arith.constant 0 : i32
    %c0_i32_1 = arith.constant 0 : i32
    return %c0_i32, %c0_i32_0 : i32, i32
  }
  func.func @transform_8(%arg0: i32) -> (i32, i32) {
    %c0_i32 = arith.constant 0 : i32
    %c0_i32_0 = arith.constant 0 : i32
    %c0_i32_1 = arith.constant 0 : i32
    return %c0_i32, %c0_i32_0 : i32, i32
  }
  func.func @transform_9(%arg0: i32) -> (i32, i32) {
    %c0_i32 = arith.constant 0 : i32
    %c0_i32_0 = arith.constant 0 : i32
    return %c0_i32, %arg0 : i32, i32
  }
}

</mosaic_0001>

<llo_original>
// kernel: tpu_custom_call.1
$region0: #{tpu_custom_call.1}
  #allocation0 [shape = 'u32[]', space=smem, size = 0x4, offset = 0x4, fixed_abs, tag = 'smem constant byte address 0x4 - core index']
  #allocation1 [shape = 'u32[144,128]{1,0:T(1,128)}', space=vmem, size = 0x12000, scoped, tag = 'internal scratch']
  %s0 = inlined_call_operand.vmem [shape: f32[8,128], index: 0, kind: input, shape index: {}]
  %s1 = inlined_call_operand.vmem [shape: f32[8,8], index: 1, kind: input, shape index: {}]
  %s2 = inlined_call_operand.vmem [shape: f32[8,1], index: 2, kind: input, shape index: {}]
  %s3 = inlined_call_operand.vmem [shape: f32[4,8], index: 3, kind: input, shape index: {}]
  %s4 = inlined_call_operand.vmem [shape: f32[4,1], index: 4, kind: input, shape index: {}]
  %s5 = inlined_call_operand.vmem [shape: f32[2,4], index: 5, kind: input, shape index: {}]
  %s6 = inlined_call_operand.vmem [shape: f32[2,1], index: 6, kind: input, shape index: {}]
  %s7 = inlined_call_operand.vmem [shape: f32[2,2], index: 7, kind: input, shape index: {}]
  %s8 = inlined_call_operand.vmem [shape: f32[2,1], index: 8, kind: input, shape index: {}]
  %s9 = inlined_call_operand.hbm [shape: f32[2,128], index: 9, kind: output, shape index: {}]
  %s10 = sld [smem:[#allocation0]]
  $region46: #{tpu_custom_call.1} parent=0
    _
  %s12 = ssub.s32 1, %s10
  %s13 = scalar_select 0, %s12, %s10
  $region1: #{tpu_custom_call.1} parent=0
    #allocation2 [shape = 'u8[1024]{0}', space=vmem, size = 0x400, scoped, tag = 'output window, operand 0, single buffered']
    #allocation3 [shape = 's32[1]{0}', space=sflag, size = 0x4, scoped, tag = 'scoped memory for tpu_custom_call.1']
    %14 = vsyncpa [#allocation3], 0
    // Predicated region
    $region2: #{tpu_custom_call.1} parent=1 // pred_check
      _
    $region3: #{tpu_custom_call.1} parent=1 // pred_check_branch
      %16 = sbr.rel (0) target = $region5
    $region4: #{tpu_custom_call.1} parent=1 // pred_region
      _
    $region5: #{tpu_custom_call.1} parent=1 // pred_fallthru
      _
    // Predicated region
    $region6: #{tpu_custom_call.1} parent=1 // pred_check
      _
    $region7: #{tpu_custom_call.1} parent=1 // pred_check_branch
      %18 = sbr.rel (0) target = $region9
    $region8: #{tpu_custom_call.1} parent=1 // pred_region
      _
    $region9: #{tpu_custom_call.1} parent=1 // pred_fallthru
      _
    // Predicated region
    $region10: #{tpu_custom_call.1} parent=1 // pred_check
      _
    $region11: #{tpu_custom_call.1} parent=1 // pred_check_branch
      %20 = sbr.rel (0) target = $region13
    $region12: #{tpu_custom_call.1} parent=1 // pred_region
      _
    $region13: #{tpu_custom_call.1} parent=1 // pred_fallthru
      _
    // Predicated region
    $region14: #{tpu_custom_call.1} parent=1 // pred_check
      _
    $region15: #{tpu_custom_call.1} parent=1 // pred_check_branch
      %22 = sbr.rel (0) target = $region17
    $region16: #{tpu_custom_call.1} parent=1 // pred_region
      _
    $region17: #{tpu_custom_call.1} parent=1 // pred_fallthru
      _
    // Predicated region
    $region18: #{tpu_custom_call.1} parent=1 // pred_check
      _
    $region19: #{tpu_custom_call.1} parent=1 // pred_check_branch
      %24 = sbr.rel (0) target = $region21
    $region20: #{tpu_custom_call.1} parent=1 // pred_region
      _
    $region21: #{tpu_custom_call.1} parent=1 // pred_fallthru
      _
    // Predicated region
    $region22: #{tpu_custom_call.1} parent=1 // pred_check
      _
    $region23: #{tpu_custom_call.1} parent=1 // pred_check_branch
      %26 = sbr.rel (0) target = $region25
    $region24: #{tpu_custom_call.1} parent=1 // pred_region
      _
    $region25: #{tpu_custom_call.1} parent=1 // pred_fallthru
      _
    // Predicated region
    $region26: #{tpu_custom_call.1} parent=1 // pred_check
      _
    $region27: #{tpu_custom_call.1} parent=1 // pred_check_branch
      %28 = sbr.rel (0) target = $region29
    $region28: #{tpu_custom_call.1} parent=1 // pred_region
      _
    $region29: #{tpu_custom_call.1} parent=1 // pred_fallthru
      _
    // Predicated region
    $region30: #{tpu_custom_call.1} parent=1 // pred_check
      _
    $region31: #{tpu_custom_call.1} parent=1 // pred_check_branch
      %30 = sbr.rel (0) target = $region33
    $region32: #{tpu_custom_call.1} parent=1 // pred_region
      _
    $region33: #{tpu_custom_call.1} parent=1 // pred_fallthru
      _
    // Predicated region
    $region34: #{tpu_custom_call.1} parent=1 // pred_check
      _
    $region35: #{tpu_custom_call.1} parent=1 // pred_check_branch
      %32 = sbr.rel (0) target = $region37
    $region36: #{tpu_custom_call.1} parent=1 // pred_region
      _
    $region37: #{tpu_custom_call.1} parent=1 // pred_fallthru
      _
    %v33 = vld [vmem:[%s0] sm:$0xff]
    %v34 = vld [vmem:[%s1] sm:$0xff]
    %v35 = vld [vmem:[%s2] sm:$0xff]
    %37 = vset.pattern.permute.xlu0 0
    %38 = vperm.xlu0 %37, %v35
    %v39 = vpop.permute.xlu0 %38
    %vm41 = vcmask 64512
    %v43 = vsel %vm41, %v34, 0
    %45 = vmatprep.subr.mxu0 0.0
    %46 = vmatpush1.msra.mxu0 %v33
    %47 = vmatprep.subr.mxu0 0.0
    %48 = vmatpush1.msra.mxu0 0.0
    %49 = vmatprep.subr.mxu0 0.0
    %50 = vmatpush1.msra.mxu0 0.0
    %51 = vmatprep.subr.mxu0 0.0
    %52 = vmatpush1.msra.mxu0 0.0
    %53 = vmatprep.subr.mxu0 0.0
    %54 = vmatpush1.msra.mxu0 0.0
    %55 = vmatprep.subr.mxu0 0.0
    %56 = vmatpush1.msra.mxu0 0.0
    %57 = vmatprep.subr.mxu0 0.0
    %58 = vmatpush1.msra.mxu0 0.0
    %59 = vmatprep.subr.mxu0 0.0
    %60 = vmatpush1.msra.mxu0 0.0
    %61 = vmatprep.subr.mxu0 0.0
    %62 = vmatpush1.msra.mxu0 0.0
    %63 = vmatprep.subr.mxu0 0.0
    %64 = vmatpush1.msra.mxu0 0.0
    %65 = vmatprep.subr.mxu0 0.0
    %66 = vmatpush1.msra.mxu0 0.0
    %67 = vmatprep.subr.mxu0 0.0
    %68 = vmatpush1.msra.mxu0 0.0
    %69 = vmatprep.subr.mxu0 0.0
    %70 = vmatpush1.msra.mxu0 0.0
    %71 = vmatprep.subr.mxu0 0.0
    %72 = vmatpush1.msra.mxu0 0.0
    %73 = vmatprep.subr.mxu0 0.0
    %74 = vmatpush1.msra.mxu0 0.0
    %75 = vmatprep.subr.mxu0 0.0
    %76 = vmatpush1.msra.mxu0 0.0
    %77 = vmatprep.subr.mxu0 0.0
    %78 = vmatpush1.msra.mxu0 0.0
    %79 = vmatprep.subr.mxu0 0.0
    %80 = vmatpush1.msra.mxu0 0.0
    %81 = vmatprep.subr.mxu0 0.0
    %82 = vmatpush1.msra.mxu0 0.0
    %83 = vmatprep.subr.mxu0 0.0
    %84 = vmatpush1.msra.mxu0 0.0
    %85 = vmatprep.subr.mxu0 0.0
    %86 = vmatpush1.msra.mxu0 0.0
    %87 = vmatprep.subr.mxu0 0.0
    %88 = vmatpush1.msra.mxu0 0.0
    %89 = vmatprep.subr.mxu0 0.0
    %90 = vmatpush1.msra.mxu0 0.0
    %91 = vmatprep.subr.mxu0 0.0
    %92 = vmatpush1.msra.mxu0 0.0
    %93 = vmatprep.subr.mxu0 0.0
    %94 = vmatpush1.msra.mxu0 0.0
    %95 = vmatprep.subr.mxu0 0.0
    %96 = vmatpush1.msra.mxu0 0.0
    %97 = vmatprep.subr.mxu0 0.0
    %98 = vmatpush1.msra.mxu0 0.0
    %99 = vmatprep.subr.mxu0 0.0
    %100 = vmatpush1.msra.mxu0 0.0
    %101 = vmatprep.subr.mxu0 0.0
    %102 = vmatpush1.msra.mxu0 0.0
    %103 = vmatprep.subr.mxu0 0.0
    %104 = vmatpush1.msra.mxu0 0.0
    %105 = vmatprep.subr.mxu0 0.0
    %106 = vmatpush1.msra.mxu0 0.0
    %107 = vmatprep.subr.mxu0 0.0
    %108 = vmatpush1.msra.mxu0 0.0
    %109 = vmatprep.mubr.f32.mxu0 0.0
    %110 = vmatmul.mubr.f32.gmra.mrb[0].mxu0 %v43
    %v111 = vpop.f32.mrb[0].mxu0
    %v112 = vadd.f32 %v39, %v111
    %v113 = vpop.f32.mrb[0].mxu0
    %114 = vdwg.mxu0
    %v115 = vxor.u32 %v112, 2147483648
    %v116 = vmul.f32 %v115, 1.442695
    %v117 = vpow.pop %v116
    %v118 = vadd.f32 %v117, 1.0
    %v119 = vrcp.pop %v118
    %v120 = vmul.f32 1.0, %v119
    %v121 = vld [vmem:[%s3] sm:$0xf]
    %v122 = vld [vmem:[%s4] sm:$0xf]
    %124 = vset.pattern.permute.xlu0 0
    %125 = vperm.xlu0 %124, %v122
    %v126 = vpop.permute.xlu0 %125
    %v129 = vsel %vm41, %v121, 0
    %131 = vmatprep.subr.mxu0 0.0
    %132 = vmatpush1.msra.mxu0 %v120
    %133 = vmatprep.subr.mxu0 0.0
    %134 = vmatpush1.msra.mxu0 0.0
    %135 = vmatprep.subr.mxu0 0.0
    %136 = vmatpush1.msra.mxu0 0.0
    %137 = vmatprep.subr.mxu0 0.0
    %138 = vmatpush1.msra.mxu0 0.0
    %139 = vmatprep.subr.mxu0 0.0
    %140 = vmatpush1.msra.mxu0 0.0
    %141 = vmatprep.subr.mxu0 0.0
    %142 = vmatpush1.msra.mxu0 0.0
    %143 = vmatprep.subr.mxu0 0.0
    %144 = vmatpush1.msra.mxu0 0.0
    %145 = vmatprep.subr.mxu0 0.0
    %146 = vmatpush1.msra.mxu0 0.0
    %147 = vmatprep.subr.mxu0 0.0
    %148 = vmatpush1.msra.mxu0 0.0
    %149 = vmatprep.subr.mxu0 0.0
    %150 = vmatpush1.msra.mxu0 0.0
    %151 = vmatprep.subr.mxu0 0.0
    %152 = vmatpush1.msra.mxu0 0.0
    %153 = vmatprep.subr.mxu0 0.0
    %154 = vmatpush1.msra.mxu0 0.0
    %155 = vmatprep.subr.mxu0 0.0
    %156 = vmatpush1.msra.mxu0 0.0
    %157 = vmatprep.subr.mxu0 0.0
    %158 = vmatpush1.msra.mxu0 0.0
    %159 = vmatprep.subr.mxu0 0.0
    %160 = vmatpush1.msra.mxu0 0.0
    %161 = vmatprep.subr.mxu0 0.0
    %162 = vmatpush1.msra.mxu0 0.0
    %163 = vmatprep.subr.mxu0 0.0
    %164 = vmatpush1.msra.mxu0 0.0
    %165 = vmatprep.subr.mxu0 0.0
    %166 = vmatpush1.msra.mxu0 0.0
    %167 = vmatprep.subr.mxu0 0.0
    %168 = vmatpush1.msra.mxu0 0.0
    %169 = vmatprep.subr.mxu0 0.0
    %170 = vmatpush1.msra.mxu0 0.0
    %171 = vmatprep.subr.mxu0 0.0
    %172 = vmatpush1.msra.mxu0 0.0
    %173 = vmatprep.subr.mxu0 0.0
    %174 = vmatpush1.msra.mxu0 0.0
    %175 = vmatprep.subr.mxu0 0.0
    %176 = vmatpush1.msra.mxu0 0.0
    %177 = vmatprep.subr.mxu0 0.0
    %178 = vmatpush1.msra.mxu0 0.0
    %179 = vmatprep.subr.mxu0 0.0
    %180 = vmatpush1.msra.mxu0 0.0
    %181 = vmatprep.subr.mxu0 0.0
    %182 = vmatpush1.msra.mxu0 0.0
    %183 = vmatprep.subr.mxu0 0.0
    %184 = vmatpush1.msra.mxu0 0.0
    %185 = vmatprep.subr.mxu0 0.0
    %186 = vmatpush1.msra.mxu0 0.0
    %187 = vmatprep.subr.mxu0 0.0
    %188 = vmatpush1.msra.mxu0 0.0
    %189 = vmatprep.subr.mxu0 0.0
    %190 = vmatpush1.msra.mxu0 0.0
    %191 = vmatprep.subr.mxu0 0.0
    %192 = vmatpush1.msra.mxu0 0.0
    %193 = vmatprep.subr.mxu0 0.0
    %194 = vmatpush1.msra.mxu0 0.0
    %195 = vmatprep.mubr.f32.mxu0 0.0
    %196 = vmatmul.mubr.f32.gmra.mrb[0].mxu0 %v129
    %v197 = vpop.f32.mrb[0].mxu0
    %v198 = vadd.f32 %v126, %v197
    %v199 = vpop.f32.mrb[0].mxu0
    %200 = vdwg.mxu0
    %v201 = vxor.u32 %v198, 2147483648
    %v202 = vmul.f32 %v201, 1.442695
    %v203 = vpow.pop %v202
    %v204 = vadd.f32 %v203, 1.0
    %v205 = vrcp.pop %v204
    %v206 = vmul.f32 1.0, %v205
    %v207 = vld [vmem:[%s5] sm:$0x3]
    %v208 = vld [vmem:[%s6] sm:$0x3]
    %210 = vset.pattern.permute.xlu0 0
    %211 = vperm.xlu0 %210, %v208
    %v212 = vpop.permute.xlu0 %211
    %vm214 = vcmask 31744
    %v216 = vsel %vm214, %v207, 0
    %vm218 = vcmask 1043456
    %v220 = vsel %vm218, %v206, 0
    %222 = vmatprep.subr.mxu0 0.0
    %223 = vmatpush1.msra.mxu0 %v220
    %224 = vmatprep.subr.mxu0 0.0
    %225 = vmatpush1.msra.mxu0 0.0
    %226 = vmatprep.subr.mxu0 0.0
    %227 = vmatpush1.msra.mxu0 0.0
    %228 = vmatprep.subr.mxu0 0.0
    %229 = vmatpush1.msra.mxu0 0.0
    %230 = vmatprep.subr.mxu0 0.0
    %231 = vmatpush1.msra.mxu0 0.0
    %232 = vmatprep.subr.mxu0 0.0
    %233 = vmatpush1.msra.mxu0 0.0
    %234 = vmatprep.subr.mxu0 0.0
    %235 = vmatpush1.msra.mxu0 0.0
    %236 = vmatprep.subr.mxu0 0.0
    %237 = vmatpush1.msra.mxu0 0.0
    %238 = vmatprep.subr.mxu0 0.0
    %239 = vmatpush1.msra.mxu0 0.0
    %240 = vmatprep.subr.mxu0 0.0
    %241 = vmatpush1.msra.mxu0 0.0
    %242 = vmatprep.subr.mxu0 0.0
    %243 = vmatpush1.msra.mxu0 0.0
    %244 = vmatprep.subr.mxu0 0.0
    %245 = vmatpush1.msra.mxu0 0.0
    %246 = vmatprep.subr.mxu0 0.0
    %247 = vmatpush1.msra.mxu0 0.0
    %248 = vmatprep.subr.mxu0 0.0
    %249 = vmatpush1.msra.mxu0 0.0
    %250 = vmatprep.subr.mxu0 0.0
    %251 = vmatpush1.msra.mxu0 0.0
    %252 = vmatprep.subr.mxu0 0.0
    %253 = vmatpush1.msra.mxu0 0.0
    %254 = vmatprep.subr.mxu0 0.0
    %255 = vmatpush1.msra.mxu0 0.0
    %256 = vmatprep.subr.mxu0 0.0
    %257 = vmatpush1.msra.mxu0 0.0
    %258 = vmatprep.subr.mxu0 0.0
    %259 = vmatpush1.msra.mxu0 0.0
    %260 = vmatprep.subr.mxu0 0.0
    %261 = vmatpush1.msra.mxu0 0.0
    %262 = vmatprep.subr.mxu0 0.0
    %263 = vmatpush1.msra.mxu0 0.0
    %264 = vmatprep.subr.mxu0 0.0
    %265 = vmatpush1.msra.mxu0 0.0
    %266 = vmatprep.subr.mxu0 0.0
    %267 = vmatpush1.msra.mxu0 0.0
    %268 = vmatprep.subr.mxu0 0.0
    %269 = vmatpush1.msra.mxu0 0.0
    %270 = vmatprep.subr.mxu0 0.0
    %271 = vmatpush1.msra.mxu0 0.0
    %272 = vmatprep.subr.mxu0 0.0
    %273 = vmatpush1.msra.mxu0 0.0
    %274 = vmatprep.subr.mxu0 0.0
    %275 = vmatpush1.msra.mxu0 0.0
    %276 = vmatprep.subr.mxu0 0.0
    %277 = vmatpush1.msra.mxu0 0.0
    %278 = vmatprep.subr.mxu0 0.0
    %279 = vmatpush1.msra.mxu0 0.0
    %280 = vmatprep.subr.mxu0 0.0
    %281 = vmatpush1.msra.mxu0 0.0
    %282 = vmatprep.subr.mxu0 0.0
    %283 = vmatpush1.msra.mxu0 0.0
    %284 = vmatprep.subr.mxu0 0.0
    %285 = vmatpush1.msra.mxu0 0.0
    %286 = vmatprep.mubr.f32.mxu0 0.0
    %287 = vmatmul.mubr.f32.gmra.mrb[0].mxu0 %v216
    %v288 = vpop.f32.mrb[0].mxu0
    %v289 = vadd.f32 %v212, %v288
    %v290 = vpop.f32.mrb[0].mxu0
    %291 = vdwg.mxu0
    %v292 = vxor.u32 %v289, 2147483648
    %v293 = vmul.f32 %v292, 1.442695
    %v294 = vpow.pop %v293
    %v295 = vadd.f32 %v294, 1.0
    %v296 = vrcp.pop %v295
    %v297 = vmul.f32 1.0, %v296
    %v298 = vld [vmem:[%s7] sm:$0x3]
    %v299 = vld [vmem:[%s8] sm:$0x3]
    %301 = vset.pattern.permute.xlu0 0
    %302 = vperm.xlu0 %301, %v299
    %v303 = vpop.permute.xlu0 %302
    %vm305 = vcmask 15360
    %v307 = vsel %vm305, %v298, 0
    %vm309 = vcmask 1041408
    %v311 = vsel %vm309, %v297, 0
    %313 = vmatprep.subr.mxu0 0.0
    %314 = vmatpush1.msra.mxu0 %v311
    %315 = vmatprep.subr.mxu0 0.0
    %316 = vmatpush1.msra.mxu0 0.0
    %317 = vmatprep.subr.mxu0 0.0
    %318 = vmatpush1.msra.mxu0 0.0
    %319 = vmatprep.subr.mxu0 0.0
    %320 = vmatpush1.msra.mxu0 0.0
    %321 = vmatprep.subr.mxu0 0.0
    %322 = vmatpush1.msra.mxu0 0.0
    %323 = vmatprep.subr.mxu0 0.0
    %324 = vmatpush1.msra.mxu0 0.0
    %325 = vmatprep.subr.mxu0 0.0
    %326 = vmatpush1.msra.mxu0 0.0
    %327 = vmatprep.subr.mxu0 0.0
    %328 = vmatpush1.msra.mxu0 0.0
    %329 = vmatprep.subr.mxu0 0.0
    %330 = vmatpush1.msra.mxu0 0.0
    %331 = vmatprep.subr.mxu0 0.0
    %332 = vmatpush1.msra.mxu0 0.0
    %333 = vmatprep.subr.mxu0 0.0
    %334 = vmatpush1.msra.mxu0 0.0
    %335 = vmatprep.subr.mxu0 0.0
    %336 = vmatpush1.msra.mxu0 0.0
    %337 = vmatprep.subr.mxu0 0.0
    %338 = vmatpush1.msra.mxu0 0.0
    %339 = vmatprep.subr.mxu0 0.0
    %340 = vmatpush1.msra.mxu0 0.0
    %341 = vmatprep.subr.mxu0 0.0
    %342 = vmatpush1.msra.mxu0 0.0
    %343 = vmatprep.subr.mxu0 0.0
    %344 = vmatpush1.msra.mxu0 0.0
    %345 = vmatprep.subr.mxu0 0.0
    %346 = vmatpush1.msra.mxu0 0.0
    %347 = vmatprep.subr.mxu0 0.0
    %348 = vmatpush1.msra.mxu0 0.0
    %349 = vmatprep.subr.mxu0 0.0
    %350 = vmatpush1.msra.mxu0 0.0
    %351 = vmatprep.subr.mxu0 0.0
    %352 = vmatpush1.msra.mxu0 0.0
    %353 = vmatprep.subr.mxu0 0.0
    %354 = vmatpush1.msra.mxu0 0.0
    %355 = vmatprep.subr.mxu0 0.0
    %356 = vmatpush1.msra.mxu0 0.0
    %357 = vmatprep.subr.mxu0 0.0
    %358 = vmatpush1.msra.mxu0 0.0
    %359 = vmatprep.subr.mxu0 0.0
    %360 = vmatpush1.msra.mxu0 0.0
    %361 = vmatprep.subr.mxu0 0.0
    %362 = vmatpush1.msra.mxu0 0.0
    %363 = vmatprep.subr.mxu0 0.0
    %364 = vmatpush1.msra.mxu0 0.0
    %365 = vmatprep.subr.mxu0 0.0
    %366 = vmatpush1.msra.mxu0 0.0
    %367 = vmatprep.subr.mxu0 0.0
    %368 = vmatpush1.msra.mxu0 0.0
    %369 = vmatprep.subr.mxu0 0.0
    %370 = vmatpush1.msra.mxu0 0.0
    %371 = vmatprep.subr.mxu0 0.0
    %372 = vmatpush1.msra.mxu0 0.0
    %373 = vmatprep.subr.mxu0 0.0
    %374 = vmatpush1.msra.mxu0 0.0
    %375 = vmatprep.subr.mxu0 0.0
    %376 = vmatpush1.msra.mxu0 0.0
    %377 = vmatprep.mubr.f32.mxu0 0.0
    %378 = vmatmul.mubr.f32.gmra.mrb[0].mxu0 %v307
    %v379 = vpop.f32.mrb[0].mxu0
    %v380 = vadd.f32 %v303, %v379
    %v381 = vpop.f32.mrb[0].mxu0
    %382 = vdwg.mxu0
    %383 = vst [vmem:[#allocation2] sm:$0x3] %v380
    // Predicated region
    $region38: #{tpu_custom_call.1} parent=1 // pred_check
      _
    $region39: #{tpu_custom_call.1} parent=1 // pred_check_branch
      %385 = sbr.rel (0) target = $region41
    $region40: #{tpu_custom_call.1} parent=1 // pred_region
      %s387 = ssub.s32 32, 32
      %388 = vsyncadd [#allocation3], %s387
      %s390 = sshll.u32 [#allocation2], 4
      %s391 = int_to_ptr.vmem [resolvable:$true] %s390
      %393 = dma.vmem_to_hbm [thread:$0]  %s391, 32, %s9, [#allocation3]
    $region41: #{tpu_custom_call.1} parent=1 // pred_fallthru
      _
    // Predicated region
    $region42: #{tpu_custom_call.1} parent=1 // pred_check
      _
    $region43: #{tpu_custom_call.1} parent=1 // pred_check_branch
      %395 = sbr.rel (0) target = $region45
    $region44: #{tpu_custom_call.1} parent=1 // pred_region
      %396 = dma.done [#allocation3], 32
    $region45: #{tpu_custom_call.1} parent=1 // pred_fallthru
      _
    %397 = vsyncpa [#allocation3], 1

</llo_original>
